<compile_context>
chip_gen: v7x
topology: tpu7x:2x2x1
jax: 0.10.0
libtpu: 0.0.40
codegen_flags: <defaults>
</compile_context>

<pallas_src>
import jax
import jax.numpy as jnp
from jax.experimental import pallas as pl
from jax.experimental.pallas import tpu as pltpu


# ----------------------------- kernel bodies ------------------------------

def _scores_and_x(x_ref, w_ref):
    """Load the x block (native dtype) and compute dense (TB, TS) f32 scores."""
    x = x_ref[...]                                    # (TB, TS, D), native dtype
    tb, _, d = x.shape
    # w is tiny (TB*D elements) -- re-broadcasting it per grid step is noise.
    w = jnp.broadcast_to(w_ref[...], (tb, 1, d))      # x.dtype
    # Batched MXU matvec -> (TB, 1, TS), squeezed to a sublane-dense (TB, TS).
    s = jnp.einsum("bqd,bkd->bqk", w, x,
                   preferred_element_type=jnp.float32)[:, 0, :]
    return x, s


def _weighted_sum(p, x):
    """(TB, TS) probs x (TB, TS, D) values -> (TB, D); MXU, f32 accumulation."""
    p3 = p.astype(x.dtype)[:, None, :]                # (TB, 1, TS) in x.dtype
    return jnp.einsum("bqk,bkd->bqd", p3, x,
                      preferred_element_type=jnp.float32)[:, 0, :]


def _attn_pool_kernel_single(x_ref, w_ref, o_ref):
    """Whole sequence in one block: plain softmax, no online state needed."""
    x, s = _scores_and_x(x_ref, w_ref)                # s: (TB, S) f32, dense
    m = jnp.max(s, axis=-1, keepdims=True)            # (TB, 1)
    p = jnp.exp(s - m)                                # (TB, S) dense
    l = jnp.sum(p, axis=-1, keepdims=True)            # (TB, 1)
    acc = _weighted_sum(p, x)                         # (TB, D) f32
    o_ref[...] = (acc * pl.reciprocal(l, approx=True)).astype(o_ref.dtype)


def _attn_pool_kernel_online(x_ref, w_ref, o_ref, m_sc, l_sc, acc_sc):
    """Flash-style online softmax over the sequence grid axis."""
    si = pl.program_id(1)

    @pl.when(si == 0)
    def _():
        m_sc[...] = jnp.full(m_sc.shape, -jnp.inf, dtype=jnp.float32)
        l_sc[...] = jnp.zeros(l_sc.shape, dtype=jnp.float32)
        acc_sc[...] = jnp.zeros(acc_sc.shape, dtype=jnp.float32)

    x, s = _scores_and_x(x_ref, w_ref)                # s: (TB, TS) f32, dense

    m_prev = m_sc[...]                                # (TB, 1)
    m_new = jnp.maximum(m_prev, jnp.max(s, axis=-1, keepdims=True))
    alpha = jnp.exp(m_prev - m_new)                   # (TB, 1)
    p = jnp.exp(s - m_new)                            # (TB, TS) dense

    l_sc[...] = alpha * l_sc[...] + jnp.sum(p, axis=-1, keepdims=True)
    acc_sc[...] = alpha * acc_sc[...] + _weighted_sum(p, x)
    m_sc[...] = m_new

    @pl.when(si == pl.num_programs(1) - 1)
    def _():
        inv_l = pl.reciprocal(l_sc[...], approx=True)     # (TB, 1)
        o_ref[...] = (acc_sc[...] * inv_l).astype(o_ref.dtype)


# ------------------------------- wrapper ----------------------------------

def _vmem_capacity_bytes():
    try:
        return int(pltpu.get_tpu_info().vmem_capacity_bytes)
    except Exception:
        return 64 << 20            # conservative (v7x-sized) fallback


def _choose_tiles(B, S, D, itemsize, pair_budget):
    # Sequence tile: full S when the minimal (tb=8) double-buffered block fits;
    # otherwise halve (keeping divisibility and the sublane rule) so one block
    # never exceeds the VMEM budget even for very long sequences (v7x 64 MiB).
    ts = S
    while (2 * 8 * ts * D * itemsize > pair_budget
           and ts % 2 == 0 and (ts // 2) % 8 == 0):
        ts //= 2
    # Batch tile: biggest that keeps the double-buffered x block in budget.
    tb = 8
    for cand in (256, 128, 64, 32, 16):
        if 2 * cand * ts * D * itemsize <= pair_budget:
            tb = cand
            break
    # Keep >= 2 batch grid steps when possible (megacore / both v7x TCs).
    while tb > 8 and -(-B // tb) < 2:
        tb //= 2
    return tb, ts


def attention_pooling(x, w, b=None, *, block_b=None, block_s=None):
    """Pallas TPU forward of AttentionPooling.

    x: (B, S, D); w: (1, D) or (D,) Linear weight; b: (1,) Linear bias.
    The bias is unused: softmax over dim=1 is shift-invariant, so it never
    changes the output.  Returns (B, D) in x.dtype.
    """
    del b
    B, S, D = x.shape
    itemsize = jnp.dtype(x.dtype).itemsize

    vmem_cap = _vmem_capacity_bytes()
    # Budget for the double-buffered x block: ~1/3 of physical VMEM, clamped.
    pair_budget = min(max(vmem_cap // 3, 8 << 20), 48 << 20)

    tb, ts = _choose_tiles(B, S, D, itemsize, pair_budget)
    if block_s is not None:
        ts = block_s
    if block_b is not None:
        tb = block_b
    assert S % ts == 0, "sequence tile must divide S"
    assert ts == S or ts % 8 == 0, "sequence tile must be a multiple of 8"
    assert tb % 8 == 0, "batch tile must be a multiple of 8"

    nsteps = -(-B // tb)
    # Prefer an even number of batch steps (v7x: 2 TCs share the parallel
    # axis) when the extra padded rows are cheap (<= ~12.5% more DMA).
    if (block_b is None and nsteps > 1 and nsteps % 2 == 1
            and ((nsteps + 1) * tb - B) * 8 <= B):
        nsteps += 1
    b_pad = nsteps * tb
    if b_pad != B:
        x = jnp.pad(x, ((0, b_pad - B), (0, 0), (0, 0)))

    # Projection weight kept in the input dtype so both MXU contractions
    # consume the native (e.g. bf16) data directly.
    w2 = jnp.asarray(w).reshape(1, D).astype(x.dtype)

    # VMEM budget: double-buffered x block (+ one staged copy of the loaded
    # block for safety), output block, f32 scratch, score/prob intermediates,
    # slack; clamped to 3/4 of physical VMEM.
    x_block = tb * ts * D * itemsize
    needed = (3 * x_block + 2 * tb * D * itemsize + tb * (D + 2) * 4
              + 6 * tb * ts * 4 + 2 * tb * D * 4 + (2 << 20))
    vmem_limit = int(min(max(needed, 32 << 20), (vmem_cap * 3) // 4))

    cost = pl.CostEstimate(
        flops=4 * b_pad * S * D,              # score matvec + weighted sum
        transcendentals=b_pad * S,            # exp
        bytes_accessed=b_pad * S * D * itemsize + b_pad * D * itemsize)

    n_seq = S // ts
    if n_seq == 1:
        out = pl.pallas_call(
            _attn_pool_kernel_single,
            out_shape=jax.ShapeDtypeStruct((b_pad, D), x.dtype),
            grid_spec=pltpu.PrefetchScalarGridSpec(
                num_scalar_prefetch=0,
                grid=(b_pad // tb,),
                in_specs=[
                    pl.BlockSpec((tb, S, D), lambda i: (i, 0, 0)),
                    pl.BlockSpec((1, D), lambda i: (0, 0)),
                ],
                out_specs=pl.BlockSpec((tb, D), lambda i: (i, 0)),
            ),
            compiler_params=pltpu.CompilerParams(
                dimension_semantics=("parallel",),
                vmem_limit_bytes=vmem_limit),
            cost_estimate=cost,
        )(x, w2)
    else:
        out = pl.pallas_call(
            _attn_pool_kernel_online,
            out_shape=jax.ShapeDtypeStruct((b_pad, D), x.dtype),
            grid_spec=pltpu.PrefetchScalarGridSpec(
                num_scalar_prefetch=0,
                grid=(b_pad // tb, n_seq),
                in_specs=[
                    pl.BlockSpec((tb, ts, D), lambda i, s: (i, s, 0)),
                    pl.BlockSpec((1, D), lambda i, s: (0, 0)),
                ],
                out_specs=pl.BlockSpec((tb, D), lambda i, s: (i, 0)),
                scratch_shapes=[
                    pltpu.VMEM((tb, 1), jnp.float32),   # running max
                    pltpu.VMEM((tb, 1), jnp.float32),   # running sum of exp
                    pltpu.VMEM((tb, D), jnp.float32),   # running weighted sum
                ],
            ),
            compiler_params=pltpu.CompilerParams(
                dimension_semantics=("parallel", "arbitrary"),
                vmem_limit_bytes=vmem_limit),
            cost_estimate=cost,
        )(x, w2)

    return out[:B] if b_pad != B else out


# ------------------------------ reference ---------------------------------

def attention_pooling_ref(x, w, b):
    xf = x.astype(jnp.float32)
    wf = jnp.asarray(w, jnp.float32).reshape(1, -1)
    bf = jnp.asarray(b, jnp.float32).reshape(1)
    scores = jnp.einsum("bsd,od->bso", xf, wf) + bf        # (B, S, 1)
    weights = jax.nn.softmax(scores, axis=1)
    return jnp.sum(weights * xf, axis=1)                   # (B, D) f32


if __name__ == "__main__":
    key = jax.random.PRNGKey(0)
    kx, kw, kb = jax.random.split(key, 3)

    # --- small, module-scale case (single-seq-step kernel) -----------------
    B, S, D = 2, 8, 32
    x = jax.random.normal(kx, (B, S, D), dtype=jnp.float32)
    w = jax.random.normal(kw, (1, D), dtype=jnp.float32) * 0.1   # Linear(D,1).weight
    b = jax.random.normal(kb, (1,), dtype=jnp.float32) * 0.1     # Linear(D,1).bias

    out = jax.block_until_ready(attention_pooling(x, w, b))
    ref = attention_pooling_ref(x, w, b)
    assert out.shape == (B, D)
    assert jnp.allclose(out, ref, atol=5e-3, rtol=5e-3), "mismatch (small case)"

    # --- larger case with forced seq tiling: batch padding, multiple batch
    #     blocks, and the flash-style online-softmax path --------------------
    B2, S2, D2 = 20, 1024, 128
    k1, k2, k3 = jax.random.split(jax.random.PRNGKey(1), 3)
    x2 = jax.random.normal(k1, (B2, S2, D2), dtype=jnp.float32)
    w2 = jax.random.normal(k2, (1, D2), dtype=jnp.float32) * 0.1
    b2 = jax.random.normal(k3, (1,), dtype=jnp.float32) * 0.1

    out2 = jax.block_until_ready(
        attention_pooling(x2, w2, b2, block_b=8, block_s=256))
    ref2 = attention_pooling_ref(x2, w2, b2)
    assert out2.shape == (B2, D2)
    assert jnp.allclose(out2, ref2, atol=5e-3, rtol=5e-3), "mismatch (online case)"

    # --- bf16 case with auto tiles: native-dtype MXU contractions ----------
    x3 = x2.astype(jnp.bfloat16)
    out3 = jax.block_until_ready(attention_pooling(x3, w2, b2))
    ref3 = attention_pooling_ref(x3, w2, b2)
    assert out3.shape == (B2, D2)
    assert jnp.allclose(out3.astype(jnp.float32), ref3, atol=3e-2, rtol=3e-2), \
        "mismatch (bf16 case)"

    print("KERNEL_OK")
</pallas_src>

<mosaic_0001>
module attributes {stable_mosaic.version = 11 : i64} {
  func.func @_attn_pool_kernel_single(%arg0: i32, %arg1: memref<8x8x32xf32, #tpu.memory_space<vmem>>, %arg2: memref<1x32xf32, #tpu.memory_space<vmem>>, %arg3: memref<8x32xf32, #tpu.memory_space<vmem>>) attributes {dimension_semantics = [#tpu.dimension_semantics<parallel>], iteration_bounds = array<i64: 1>, scalar_prefetch = 0 : i64, scratch_operands = 0 : i64, tpu.core_type = #tpu.core_type<tc>, window_params = [{transform_indices = @transform_0, window_bounds = array<i64: 8, 8, 32>}, {pipeline_mode = #tpu.pipeline_mode<synchronous>, transform_indices = @transform_1, window_bounds = array<i64: 1, 32>}, {transform_indices = @transform_2, window_bounds = array<i64: 8, 32>}]} {
    %c0 = arith.constant 0 : index
    %c0_0 = arith.constant 0 : index
    %c0_1 = arith.constant 0 : index
    %0 = vector.load %arg1[%c0, %c0_0, %c0_1] : memref<8x8x32xf32, #tpu.memory_space<vmem>>, vector<8x8x32xf32>
    %c0_2 = arith.constant 0 : index
    %c0_3 = arith.constant 0 : index
    %1 = vector.load %arg2[%c0_2, %c0_3] : memref<1x32xf32, #tpu.memory_space<vmem>>, vector<1x32xf32>
    %2 = vector.shape_cast %1 : vector<1x32xf32> to vector<1x1x32xf32>
    %3 = vector.broadcast %2 : vector<1x1x32xf32> to vector<8x1x32xf32>
    "tpu.trace_start"() <{level = 10 : i32, message = "bqd,bkd->bqk"}> : () -> ()
    %cst = arith.constant dense<0.000000e+00> : vector<8x1x8xf32>
    %4 = tpu.matmul %3, %0, %cst {dimension_numbers = #tpu.dot_dimension_numbers<[2], [2], [1], [1], [0, 0, 0, 1, 1, 1], [0], [0]>} : vector<8x1x32xf32>, vector<8x8x32xf32>, vector<8x1x8xf32> -> vector<8x1x8xf32>
    "tpu.trace_stop"() : () -> ()
    %5 = vector.shape_cast %4 : vector<8x1x8xf32> to vector<8x8xf32>
    %cst_4 = arith.constant dense<0xFF800000> : vector<8xf32>
    %6 = vector.multi_reduction <maximumf>, %5, %cst_4 [1] : vector<8x8xf32> to vector<8xf32>
    %7 = vector.shape_cast %6 : vector<8xf32> to vector<8x1xf32>
    %8 = vector.broadcast %7 : vector<8x1xf32> to vector<8x8xf32>
    %9 = arith.subf %5, %8 : vector<8x8xf32>
    %10 = math.exp %9 : vector<8x8xf32>
    %cst_5 = arith.constant dense<0.000000e+00> : vector<8xf32>
    %11 = vector.multi_reduction <add>, %10, %cst_5 [1] : vector<8x8xf32> to vector<8xf32>
    %12 = vector.shape_cast %11 : vector<8xf32> to vector<8x1xf32>
    %13 = vector.shape_cast %10 : vector<8x8xf32> to vector<8x1x8xf32>
    "tpu.trace_start"() <{level = 10 : i32, message = "bqk,bkd->bqd"}> : () -> ()
    %cst_6 = arith.constant dense<0.000000e+00> : vector<8x1x32xf32>
    %14 = tpu.matmul %13, %0, %cst_6 {dimension_numbers = #tpu.dot_dimension_numbers<[2], [1], [1], [2], [0, 0, 0, 1, 1, 2], [0], [0]>} : vector<8x1x8xf32>, vector<8x8x32xf32>, vector<8x1x32xf32> -> vector<8x1x32xf32>
    "tpu.trace_stop"() : () -> ()
    %15 = vector.shape_cast %14 : vector<8x1x32xf32> to vector<8x32xf32>
    %16 = tpu.reciprocal %12 {approx = true} : vector<8x1xf32> -> vector<8x1xf32>
    %17 = vector.broadcast %16 : vector<8x1xf32> to vector<8x32xf32>
    %18 = arith.mulf %15, %17 : vector<8x32xf32>
    %c0_7 = arith.constant 0 : index
    %c0_8 = arith.constant 0 : index
    %19 = vector.load %arg3[%c0_7, %c0_8] : memref<8x32xf32, #tpu.memory_space<vmem>>, vector<8x32xf32>
    tpu.vector_store %arg3[%c0_7, %c0_8], %18 {strides = array<i32>} : memref<8x32xf32, #tpu.memory_space<vmem>>, vector<8x32xf32>,
    return
  }
  func.func @transform_0(%arg0: i32) -> (i32, i32, i32) {
    %c0_i32 = arith.constant 0 : i32
    %c0_i32_0 = arith.constant 0 : i32
    %c0_i32_1 = arith.constant 0 : i32
    return %arg0, %c0_i32, %c0_i32_0 : i32, i32, i32
  }
  func.func @transform_1(%arg0: i32) -> (i32, i32) {
    %c0_i32 = arith.constant 0 : i32
    %c0_i32_0 = arith.constant 0 : i32
    %c0_i32_1 = arith.constant 0 : i32
    return %c0_i32, %c0_i32_0 : i32, i32
  }
  func.func @transform_2(%arg0: i32) -> (i32, i32) {
    %c0_i32 = arith.constant 0 : i32
    %c0_i32_0 = arith.constant 0 : i32
    return %arg0, %c0_i32 : i32, i32
  }
}

</mosaic_0001>

<llo_original>
// kernel: tpu_custom_call.1
$region0: #{tpu_custom_call.1}
  #allocation0 [shape = 'u32[]', space=smem, size = 0x4, offset = 0x4, fixed_abs, tag = 'smem constant byte address 0x4 - core index']
  #allocation1 [shape = 'u32[144,128]{1,0:T(1,128)}', space=vmem, size = 0x12000, scoped, tag = 'internal scratch']
  %s0 = inlined_call_operand.hbm [shape: f32[8,8,32], index: 0, kind: input, shape index: {}]
  %s1 = inlined_call_operand.vmem [shape: f32[1,32], index: 1, kind: input, shape index: {}]
  %s2 = inlined_call_operand.hbm [shape: f32[8,32], index: 2, kind: output, shape index: {}]
  %s3 = sld [smem:[#allocation0]]
  $region22: #{tpu_custom_call.1} parent=0
    _
  %s5 = ssub.s32 1, %s3
  %s6 = scalar_select 0, %s5, %s3
  $region1: #{tpu_custom_call.1} parent=0
    #allocation2 [shape = 'u8[32768]{0}', space=vmem, size = 0x8000, scoped, tag = 'input window, operand 0, single buffered']
    #allocation3 [shape = 's32[1]{0}', space=sflag, size = 0x4, scoped, tag = 'scoped memory for tpu_custom_call.1']
    #allocation4 [shape = 's32[1]{0}', space=sflag, size = 0x4, scoped, tag = 'scoped memory for tpu_custom_call.1']
    #allocation5 [shape = 'u8[4096]{0}', space=vmem, size = 0x1000, scoped, tag = 'output window, operand 0, single buffered']
    %7 = vsyncpa [#allocation3], 0
    %8 = vsyncpa [#allocation4], 0
    // Predicated region
    $region2: #{tpu_custom_call.1} parent=1 // pred_check
      _
    $region3: #{tpu_custom_call.1} parent=1 // pred_check_branch
      %10 = sbr.rel (0) target = $region5
    $region4: #{tpu_custom_call.1} parent=1 // pred_region
      %s12 = ssub.s32 1024, 1024
      %13 = vsyncadd [#allocation3], %s12
      %s14 = sshll.u32 [#allocation2], 4
      %s15 = int_to_ptr.vmem [resolvable:$true] %s14
      %20 = dma.hbm_to_vmem [thread:$0]  %s0, 1024, %s15, [#allocation3], 128, 128, 8
    $region5: #{tpu_custom_call.1} parent=1 // pred_fallthru
      _
    // Predicated region
    $region6: #{tpu_custom_call.1} parent=1 // pred_check
      _
    $region7: #{tpu_custom_call.1} parent=1 // pred_check_branch
      %22 = sbr.rel (0) target = $region9
    $region8: #{tpu_custom_call.1} parent=1 // pred_region
      _
    $region9: #{tpu_custom_call.1} parent=1 // pred_fallthru
      _
    // Predicated region
    $region10: #{tpu_custom_call.1} parent=1 // pred_check
      _
    $region11: #{tpu_custom_call.1} parent=1 // pred_check_branch
      %24 = sbr.rel (0) target = $region13
    $region12: #{tpu_custom_call.1} parent=1 // pred_region
      %25 = dma.done [#allocation3], 1024
    $region13: #{tpu_custom_call.1} parent=1 // pred_fallthru
      _
    %v26 = vld [vmem:[#allocation2] sm:$0xff]
    %v27 = vld [vmem:[#allocation2 + $0x8] sm:$0xff]
    %v28 = vld [vmem:[#allocation2 + $0x10] sm:$0xff]
    %v29 = vld [vmem:[#allocation2 + $0x18] sm:$0xff]
    %v30 = vld [vmem:[#allocation2 + $0x20] sm:$0xff]
    %v31 = vld [vmem:[#allocation2 + $0x28] sm:$0xff]
    %v32 = vld [vmem:[#allocation2 + $0x30] sm:$0xff]
    %v33 = vld [vmem:[#allocation2 + $0x38] sm:$0xff]
    %v34 = vld [vmem:[%s1] sm:$0x1]
    %vm35 = vcmask 261120
    %v37 = vsel %vm35, %v34, 0
    %v40 = vsel %vm35, %v26, 0
    %42 = vmatprep.subr.mxu0 0.0
    %43 = vmatpush1.xpose.msra.mxu0 %v40
    %44 = vmatprep.subr.mxu0 0.0
    %45 = vmatpush1.xpose.msra.mxu0 0.0
    %46 = vmatprep.subr.mxu0 0.0
    %47 = vmatpush1.xpose.msra.mxu0 0.0
    %48 = vmatprep.subr.mxu0 0.0
    %49 = vmatpush1.xpose.msra.mxu0 0.0
    %50 = vmatprep.subr.mxu0 0.0
    %51 = vmatpush1.xpose.msra.mxu0 0.0
    %52 = vmatprep.subr.mxu0 0.0
    %53 = vmatpush1.xpose.msra.mxu0 0.0
    %54 = vmatprep.subr.mxu0 0.0
    %55 = vmatpush1.xpose.msra.mxu0 0.0
    %56 = vmatprep.subr.mxu0 0.0
    %57 = vmatpush1.xpose.msra.mxu0 0.0
    %58 = vmatprep.subr.mxu0 0.0
    %59 = vmatpush1.xpose.msra.mxu0 0.0
    %60 = vmatprep.subr.mxu0 0.0
    %61 = vmatpush1.xpose.msra.mxu0 0.0
    %62 = vmatprep.subr.mxu0 0.0
    %63 = vmatpush1.xpose.msra.mxu0 0.0
    %64 = vmatprep.subr.mxu0 0.0
    %65 = vmatpush1.xpose.msra.mxu0 0.0
    %66 = vmatprep.subr.mxu0 0.0
    %67 = vmatpush1.xpose.msra.mxu0 0.0
    %68 = vmatprep.subr.mxu0 0.0
    %69 = vmatpush1.xpose.msra.mxu0 0.0
    %70 = vmatprep.subr.mxu0 0.0
    %71 = vmatpush1.xpose.msra.mxu0 0.0
    %72 = vmatprep.subr.mxu0 0.0
    %73 = vmatpush1.xpose.msra.mxu0 0.0
    %74 = vmatprep.subr.mxu0 0.0
    %75 = vmatpush1.xpose.msra.mxu0 0.0
    %76 = vmatprep.subr.mxu0 0.0
    %77 = vmatpush1.xpose.msra.mxu0 0.0
    %78 = vmatprep.subr.mxu0 0.0
    %79 = vmatpush1.xpose.msra.mxu0 0.0
    %80 = vmatprep.subr.mxu0 0.0
    %81 = vmatpush1.xpose.msra.mxu0 0.0
    %82 = vmatprep.subr.mxu0 0.0
    %83 = vmatpush1.xpose.msra.mxu0 0.0
    %84 = vmatprep.subr.mxu0 0.0
    %85 = vmatpush1.xpose.msra.mxu0 0.0
    %86 = vmatprep.subr.mxu0 0.0
    %87 = vmatpush1.xpose.msra.mxu0 0.0
    %88 = vmatprep.subr.mxu0 0.0
    %89 = vmatpush1.xpose.msra.mxu0 0.0
    %90 = vmatprep.subr.mxu0 0.0
    %91 = vmatpush1.xpose.msra.mxu0 0.0
    %92 = vmatprep.subr.mxu0 0.0
    %93 = vmatpush1.xpose.msra.mxu0 0.0
    %94 = vmatprep.subr.mxu0 0.0
    %95 = vmatpush1.xpose.msra.mxu0 0.0
    %96 = vmatprep.subr.mxu0 0.0
    %97 = vmatpush1.xpose.msra.mxu0 0.0
    %98 = vmatprep.subr.mxu0 0.0
    %99 = vmatpush1.xpose.msra.mxu0 0.0
    %100 = vmatprep.subr.mxu0 0.0
    %101 = vmatpush1.xpose.msra.mxu0 0.0
    %102 = vmatprep.subr.mxu0 0.0
    %103 = vmatpush1.xpose.msra.mxu0 0.0
    %104 = vmatprep.subr.mxu0 0.0
    %105 = vmatpush1.xpose.msra.mxu0 0.0
    %106 = vmatprep.mubr.f32.mxu0 0.0
    %107 = vmatmul.mubr.f32.gmra.mrb[0].mxu0 %v37
    %v108 = vpop.f32.mrb[0].mxu0
    %v109 = vadd.f32 0.0, %v108
    %v110 = vpop.f32.mrb[0].mxu0
    %111 = vdwg.mxu0
    %v113 = vsel %vm35, %v27, 0
    %115 = vmatprep.subr.mxu0 0.0
    %116 = vmatpush1.xpose.msra.mxu0 %v113
    %117 = vmatprep.subr.mxu0 0.0
    %118 = vmatpush1.xpose.msra.mxu0 0.0
    %119 = vmatprep.subr.mxu0 0.0
    %120 = vmatpush1.xpose.msra.mxu0 0.0
    %121 = vmatprep.subr.mxu0 0.0
    %122 = vmatpush1.xpose.msra.mxu0 0.0
    %123 = vmatprep.subr.mxu0 0.0
    %124 = vmatpush1.xpose.msra.mxu0 0.0
    %125 = vmatprep.subr.mxu0 0.0
    %126 = vmatpush1.xpose.msra.mxu0 0.0
    %127 = vmatprep.subr.mxu0 0.0
    %128 = vmatpush1.xpose.msra.mxu0 0.0
    %129 = vmatprep.subr.mxu0 0.0
    %130 = vmatpush1.xpose.msra.mxu0 0.0
    %131 = vmatprep.subr.mxu0 0.0
    %132 = vmatpush1.xpose.msra.mxu0 0.0
    %133 = vmatprep.subr.mxu0 0.0
    %134 = vmatpush1.xpose.msra.mxu0 0.0
    %135 = vmatprep.subr.mxu0 0.0
    %136 = vmatpush1.xpose.msra.mxu0 0.0
    %137 = vmatprep.subr.mxu0 0.0
    %138 = vmatpush1.xpose.msra.mxu0 0.0
    %139 = vmatprep.subr.mxu0 0.0
    %140 = vmatpush1.xpose.msra.mxu0 0.0
    %141 = vmatprep.subr.mxu0 0.0
    %142 = vmatpush1.xpose.msra.mxu0 0.0
    %143 = vmatprep.subr.mxu0 0.0
    %144 = vmatpush1.xpose.msra.mxu0 0.0
    %145 = vmatprep.subr.mxu0 0.0
    %146 = vmatpush1.xpose.msra.mxu0 0.0
    %147 = vmatprep.subr.mxu0 0.0
    %148 = vmatpush1.xpose.msra.mxu0 0.0
    %149 = vmatprep.subr.mxu0 0.0
    %150 = vmatpush1.xpose.msra.mxu0 0.0
    %151 = vmatprep.subr.mxu0 0.0
    %152 = vmatpush1.xpose.msra.mxu0 0.0
    %153 = vmatprep.subr.mxu0 0.0
    %154 = vmatpush1.xpose.msra.mxu0 0.0
    %155 = vmatprep.subr.mxu0 0.0
    %156 = vmatpush1.xpose.msra.mxu0 0.0
    %157 = vmatprep.subr.mxu0 0.0
    %158 = vmatpush1.xpose.msra.mxu0 0.0
    %159 = vmatprep.subr.mxu0 0.0
    %160 = vmatpush1.xpose.msra.mxu0 0.0
    %161 = vmatprep.subr.mxu0 0.0
    %162 = vmatpush1.xpose.msra.mxu0 0.0
    %163 = vmatprep.subr.mxu0 0.0
    %164 = vmatpush1.xpose.msra.mxu0 0.0
    %165 = vmatprep.subr.mxu0 0.0
    %166 = vmatpush1.xpose.msra.mxu0 0.0
    %167 = vmatprep.subr.mxu0 0.0
    %168 = vmatpush1.xpose.msra.mxu0 0.0
    %169 = vmatprep.subr.mxu0 0.0
    %170 = vmatpush1.xpose.msra.mxu0 0.0
    %171 = vmatprep.subr.mxu0 0.0
    %172 = vmatpush1.xpose.msra.mxu0 0.0
    %173 = vmatprep.subr.mxu0 0.0
    %174 = vmatpush1.xpose.msra.mxu0 0.0
    %175 = vmatprep.subr.mxu0 0.0
    %176 = vmatpush1.xpose.msra.mxu0 0.0
    %177 = vmatprep.subr.mxu0 0.0
    %178 = vmatpush1.xpose.msra.mxu0 0.0
    %179 = vmatprep.mubr.f32.mxu0 0.0
    %180 = vmatmul.mubr.f32.gmra.mrb[0].mxu0 %v37
    %v181 = vpop.f32.mrb[0].mxu0
    %v182 = vadd.f32 0.0, %v181
    %v183 = vpop.f32.mrb[0].mxu0
    %184 = vdwg.mxu0
    %v186 = vsel %vm35, %v28, 0
    %188 = vmatprep.subr.mxu0 0.0
    %189 = vmatpush1.xpose.msra.mxu0 %v186
    %190 = vmatprep.subr.mxu0 0.0
    %191 = vmatpush1.xpose.msra.mxu0 0.0
    %192 = vmatprep.subr.mxu0 0.0
    %193 = vmatpush1.xpose.msra.mxu0 0.0
    %194 = vmatprep.subr.mxu0 0.0
    %195 = vmatpush1.xpose.msra.mxu0 0.0
    %196 = vmatprep.subr.mxu0 0.0
    %197 = vmatpush1.xpose.msra.mxu0 0.0
    %198 = vmatprep.subr.mxu0 0.0
    %199 = vmatpush1.xpose.msra.mxu0 0.0
    %200 = vmatprep.subr.mxu0 0.0
    %201 = vmatpush1.xpose.msra.mxu0 0.0
    %202 = vmatprep.subr.mxu0 0.0
    %203 = vmatpush1.xpose.msra.mxu0 0.0
    %204 = vmatprep.subr.mxu0 0.0
    %205 = vmatpush1.xpose.msra.mxu0 0.0
    %206 = vmatprep.subr.mxu0 0.0
    %207 = vmatpush1.xpose.msra.mxu0 0.0
    %208 = vmatprep.subr.mxu0 0.0
    %209 = vmatpush1.xpose.msra.mxu0 0.0
    %210 = vmatprep.subr.mxu0 0.0
    %211 = vmatpush1.xpose.msra.mxu0 0.0
    %212 = vmatprep.subr.mxu0 0.0
    %213 = vmatpush1.xpose.msra.mxu0 0.0
    %214 = vmatprep.subr.mxu0 0.0
    %215 = vmatpush1.xpose.msra.mxu0 0.0
    %216 = vmatprep.subr.mxu0 0.0
    %217 = vmatpush1.xpose.msra.mxu0 0.0
    %218 = vmatprep.subr.mxu0 0.0
    %219 = vmatpush1.xpose.msra.mxu0 0.0
    %220 = vmatprep.subr.mxu0 0.0
    %221 = vmatpush1.xpose.msra.mxu0 0.0
    %222 = vmatprep.subr.mxu0 0.0
    %223 = vmatpush1.xpose.msra.mxu0 0.0
    %224 = vmatprep.subr.mxu0 0.0
    %225 = vmatpush1.xpose.msra.mxu0 0.0
    %226 = vmatprep.subr.mxu0 0.0
    %227 = vmatpush1.xpose.msra.mxu0 0.0
    %228 = vmatprep.subr.mxu0 0.0
    %229 = vmatpush1.xpose.msra.mxu0 0.0
    %230 = vmatprep.subr.mxu0 0.0
    %231 = vmatpush1.xpose.msra.mxu0 0.0
    %232 = vmatprep.subr.mxu0 0.0
    %233 = vmatpush1.xpose.msra.mxu0 0.0
    %234 = vmatprep.subr.mxu0 0.0
    %235 = vmatpush1.xpose.msra.mxu0 0.0
    %236 = vmatprep.subr.mxu0 0.0
    %237 = vmatpush1.xpose.msra.mxu0 0.0
    %238 = vmatprep.subr.mxu0 0.0
    %239 = vmatpush1.xpose.msra.mxu0 0.0
    %240 = vmatprep.subr.mxu0 0.0
    %241 = vmatpush1.xpose.msra.mxu0 0.0
    %242 = vmatprep.subr.mxu0 0.0
    %243 = vmatpush1.xpose.msra.mxu0 0.0
    %244 = vmatprep.subr.mxu0 0.0
    %245 = vmatpush1.xpose.msra.mxu0 0.0
    %246 = vmatprep.subr.mxu0 0.0
    %247 = vmatpush1.xpose.msra.mxu0 0.0
    %248 = vmatprep.subr.mxu0 0.0
    %249 = vmatpush1.xpose.msra.mxu0 0.0
    %250 = vmatprep.subr.mxu0 0.0
    %251 = vmatpush1.xpose.msra.mxu0 0.0
    %252 = vmatprep.mubr.f32.mxu0 0.0
    %253 = vmatmul.mubr.f32.gmra.mrb[0].mxu0 %v37
    %v254 = vpop.f32.mrb[0].mxu0
    %v255 = vadd.f32 0.0, %v254
    %v256 = vpop.f32.mrb[0].mxu0
    %257 = vdwg.mxu0
    %v259 = vsel %vm35, %v29, 0
    %261 = vmatprep.subr.mxu0 0.0
    %262 = vmatpush1.xpose.msra.mxu0 %v259
    %263 = vmatprep.subr.mxu0 0.0
    %264 = vmatpush1.xpose.msra.mxu0 0.0
    %265 = vmatprep.subr.mxu0 0.0
    %266 = vmatpush1.xpose.msra.mxu0 0.0
    %267 = vmatprep.subr.mxu0 0.0
    %268 = vmatpush1.xpose.msra.mxu0 0.0
    %269 = vmatprep.subr.mxu0 0.0
    %270 = vmatpush1.xpose.msra.mxu0 0.0
    %271 = vmatprep.subr.mxu0 0.0
    %272 = vmatpush1.xpose.msra.mxu0 0.0
    %273 = vmatprep.subr.mxu0 0.0
    %274 = vmatpush1.xpose.msra.mxu0 0.0
    %275 = vmatprep.subr.mxu0 0.0
    %276 = vmatpush1.xpose.msra.mxu0 0.0
    %277 = vmatprep.subr.mxu0 0.0
    %278 = vmatpush1.xpose.msra.mxu0 0.0
    %279 = vmatprep.subr.mxu0 0.0
    %280 = vmatpush1.xpose.msra.mxu0 0.0
    %281 = vmatprep.subr.mxu0 0.0
    %282 = vmatpush1.xpose.msra.mxu0 0.0
    %283 = vmatprep.subr.mxu0 0.0
    %284 = vmatpush1.xpose.msra.mxu0 0.0
    %285 = vmatprep.subr.mxu0 0.0
    %286 = vmatpush1.xpose.msra.mxu0 0.0
    %287 = vmatprep.subr.mxu0 0.0
    %288 = vmatpush1.xpose.msra.mxu0 0.0
    %289 = vmatprep.subr.mxu0 0.0
    %290 = vmatpush1.xpose.msra.mxu0 0.0
    %291 = vmatprep.subr.mxu0 0.0
    %292 = vmatpush1.xpose.msra.mxu0 0.0
    %293 = vmatprep.subr.mxu0 0.0
    %294 = vmatpush1.xpose.msra.mxu0 0.0
    %295 = vmatprep.subr.mxu0 0.0
    %296 = vmatpush1.xpose.msra.mxu0 0.0
    %297 = vmatprep.subr.mxu0 0.0
    %298 = vmatpush1.xpose.msra.mxu0 0.0
    %299 = vmatprep.subr.mxu0 0.0
    %300 = vmatpush1.xpose.msra.mxu0 0.0
    %301 = vmatprep.subr.mxu0 0.0
    %302 = vmatpush1.xpose.msra.mxu0 0.0
    %303 = vmatprep.subr.mxu0 0.0
    %304 = vmatpush1.xpose.msra.mxu0 0.0
    %305 = vmatprep.subr.mxu0 0.0
    %306 = vmatpush1.xpose.msra.mxu0 0.0
    %307 = vmatprep.subr.mxu0 0.0
    %308 = vmatpush1.xpose.msra.mxu0 0.0
    %309 = vmatprep.subr.mxu0 0.0
    %310 = vmatpush1.xpose.msra.mxu0 0.0
    %311 = vmatprep.subr.mxu0 0.0
    %312 = vmatpush1.xpose.msra.mxu0 0.0
    %313 = vmatprep.subr.mxu0 0.0
    %314 = vmatpush1.xpose.msra.mxu0 0.0
    %315 = vmatprep.subr.mxu0 0.0
    %316 = vmatpush1.xpose.msra.mxu0 0.0
    %317 = vmatprep.subr.mxu0 0.0
    %318 = vmatpush1.xpose.msra.mxu0 0.0
    %319 = vmatprep.subr.mxu0 0.0
    %320 = vmatpush1.xpose.msra.mxu0 0.0
    %321 = vmatprep.subr.mxu0 0.0
    %322 = vmatpush1.xpose.msra.mxu0 0.0
    %323 = vmatprep.subr.mxu0 0.0
    %324 = vmatpush1.xpose.msra.mxu0 0.0
    %325 = vmatprep.mubr.f32.mxu0 0.0
    %326 = vmatmul.mubr.f32.gmra.mrb[0].mxu0 %v37
    %v327 = vpop.f32.mrb[0].mxu0
    %v328 = vadd.f32 0.0, %v327
    %v329 = vpop.f32.mrb[0].mxu0
    %330 = vdwg.mxu0
    %v332 = vsel %vm35, %v30, 0
    %334 = vmatprep.subr.mxu0 0.0
    %335 = vmatpush1.xpose.msra.mxu0 %v332
    %336 = vmatprep.subr.mxu0 0.0
    %337 = vmatpush1.xpose.msra.mxu0 0.0
    %338 = vmatprep.subr.mxu0 0.0
    %339 = vmatpush1.xpose.msra.mxu0 0.0
    %340 = vmatprep.subr.mxu0 0.0
    %341 = vmatpush1.xpose.msra.mxu0 0.0
    %342 = vmatprep.subr.mxu0 0.0
    %343 = vmatpush1.xpose.msra.mxu0 0.0
    %344 = vmatprep.subr.mxu0 0.0
    %345 = vmatpush1.xpose.msra.mxu0 0.0
    %346 = vmatprep.subr.mxu0 0.0
    %347 = vmatpush1.xpose.msra.mxu0 0.0
    %348 = vmatprep.subr.mxu0 0.0
    %349 = vmatpush1.xpose.msra.mxu0 0.0
    %350 = vmatprep.subr.mxu0 0.0
    %351 = vmatpush1.xpose.msra.mxu0 0.0
    %352 = vmatprep.subr.mxu0 0.0
    %353 = vmatpush1.xpose.msra.mxu0 0.0
    %354 = vmatprep.subr.mxu0 0.0
    %355 = vmatpush1.xpose.msra.mxu0 0.0
    %356 = vmatprep.subr.mxu0 0.0
    %357 = vmatpush1.xpose.msra.mxu0 0.0
    %358 = vmatprep.subr.mxu0 0.0
    %359 = vmatpush1.xpose.msra.mxu0 0.0
    %360 = vmatprep.subr.mxu0 0.0
    %361 = vmatpush1.xpose.msra.mxu0 0.0
    %362 = vmatprep.subr.mxu0 0.0
    %363 = vmatpush1.xpose.msra.mxu0 0.0
    %364 = vmatprep.subr.mxu0 0.0
    %365 = vmatpush1.xpose.msra.mxu0 0.0
    %366 = vmatprep.subr.mxu0 0.0
    %367 = vmatpush1.xpose.msra.mxu0 0.0
    %368 = vmatprep.subr.mxu0 0.0
    %369 = vmatpush1.xpose.msra.mxu0 0.0
    %370 = vmatprep.subr.mxu0 0.0
    %371 = vmatpush1.xpose.msra.mxu0 0.0
    %372 = vmatprep.subr.mxu0 0.0
    %373 = vmatpush1.xpose.msra.mxu0 0.0
    %374 = vmatprep.subr.mxu0 0.0
    %375 = vmatpush1.xpose.msra.mxu0 0.0
    %376 = vmatprep.subr.mxu0 0.0
    %377 = vmatpush1.xpose.msra.mxu0 0.0
    %378 = vmatprep.subr.mxu0 0.0
    %379 = vmatpush1.xpose.msra.mxu0 0.0
    %380 = vmatprep.subr.mxu0 0.0
    %381 = vmatpush1.xpose.msra.mxu0 0.0
    %382 = vmatprep.subr.mxu0 0.0
    %383 = vmatpush1.xpose.msra.mxu0 0.0
    %384 = vmatprep.subr.mxu0 0.0
    %385 = vmatpush1.xpose.msra.mxu0 0.0
    %386 = vmatprep.subr.mxu0 0.0
    %387 = vmatpush1.xpose.msra.mxu0 0.0
    %388 = vmatprep.subr.mxu0 0.0
    %389 = vmatpush1.xpose.msra.mxu0 0.0
    %390 = vmatprep.subr.mxu0 0.0
    %391 = vmatpush1.xpose.msra.mxu0 0.0
    %392 = vmatprep.subr.mxu0 0.0
    %393 = vmatpush1.xpose.msra.mxu0 0.0
    %394 = vmatprep.subr.mxu0 0.0
    %395 = vmatpush1.xpose.msra.mxu0 0.0
    %396 = vmatprep.subr.mxu0 0.0
    %397 = vmatpush1.xpose.msra.mxu0 0.0
    %398 = vmatprep.mubr.f32.mxu0 0.0
    %399 = vmatmul.mubr.f32.gmra.mrb[0].mxu0 %v37
    %v400 = vpop.f32.mrb[0].mxu0
    %v401 = vadd.f32 0.0, %v400
    %v402 = vpop.f32.mrb[0].mxu0
    %403 = vdwg.mxu0
    %v405 = vsel %vm35, %v31, 0
    %407 = vmatprep.subr.mxu0 0.0
    %408 = vmatpush1.xpose.msra.mxu0 %v405
    %409 = vmatprep.subr.mxu0 0.0
    %410 = vmatpush1.xpose.msra.mxu0 0.0
    %411 = vmatprep.subr.mxu0 0.0
    %412 = vmatpush1.xpose.msra.mxu0 0.0
    %413 = vmatprep.subr.mxu0 0.0
    %414 = vmatpush1.xpose.msra.mxu0 0.0
    %415 = vmatprep.subr.mxu0 0.0
    %416 = vmatpush1.xpose.msra.mxu0 0.0
    %417 = vmatprep.subr.mxu0 0.0
    %418 = vmatpush1.xpose.msra.mxu0 0.0
    %419 = vmatprep.subr.mxu0 0.0
    %420 = vmatpush1.xpose.msra.mxu0 0.0
    %421 = vmatprep.subr.mxu0 0.0
    %422 = vmatpush1.xpose.msra.mxu0 0.0
    %423 = vmatprep.subr.mxu0 0.0
    %424 = vmatpush1.xpose.msra.mxu0 0.0
    %425 = vmatprep.subr.mxu0 0.0
    %426 = vmatpush1.xpose.msra.mxu0 0.0
    %427 = vmatprep.subr.mxu0 0.0
    %428 = vmatpush1.xpose.msra.mxu0 0.0
    %429 = vmatprep.subr.mxu0 0.0
    %430 = vmatpush1.xpose.msra.mxu0 0.0
    %431 = vmatprep.subr.mxu0 0.0
    %432 = vmatpush1.xpose.msra.mxu0 0.0
    %433 = vmatprep.subr.mxu0 0.0
    %434 = vmatpush1.xpose.msra.mxu0 0.0
    %435 = vmatprep.subr.mxu0 0.0
    %436 = vmatpush1.xpose.msra.mxu0 0.0
    %437 = vmatprep.subr.mxu0 0.0
    %438 = vmatpush1.xpose.msra.mxu0 0.0
    %439 = vmatprep.subr.mxu0 0.0
    %440 = vmatpush1.xpose.msra.mxu0 0.0
    %441 = vmatprep.subr.mxu0 0.0
    %442 = vmatpush1.xpose.msra.mxu0 0.0
    %443 = vmatprep.subr.mxu0 0.0
    %444 = vmatpush1.xpose.msra.mxu0 0.0
    %445 = vmatprep.subr.mxu0 0.0
    %446 = vmatpush1.xpose.msra.mxu0 0.0
    %447 = vmatprep.subr.mxu0 0.0
    %448 = vmatpush1.xpose.msra.mxu0 0.0
    %449 = vmatprep.subr.mxu0 0.0
    %450 = vmatpush1.xpose.msra.mxu0 0.0
    %451 = vmatprep.subr.mxu0 0.0
    %452 = vmatpush1.xpose.msra.mxu0 0.0
    %453 = vmatprep.subr.mxu0 0.0
    %454 = vmatpush1.xpose.msra.mxu0 0.0
    %455 = vmatprep.subr.mxu0 0.0
    %456 = vmatpush1.xpose.msra.mxu0 0.0
    %457 = vmatprep.subr.mxu0 0.0
    %458 = vmatpush1.xpose.msra.mxu0 0.0
    %459 = vmatprep.subr.mxu0 0.0
    %460 = vmatpush1.xpose.msra.mxu0 0.0
    %461 = vmatprep.subr.mxu0 0.0
    %462 = vmatpush1.xpose.msra.mxu0 0.0
    %463 = vmatprep.subr.mxu0 0.0
    %464 = vmatpush1.xpose.msra.mxu0 0.0
    %465 = vmatprep.subr.mxu0 0.0
    %466 = vmatpush1.xpose.msra.mxu0 0.0
    %467 = vmatprep.subr.mxu0 0.0
    %468 = vmatpush1.xpose.msra.mxu0 0.0
    %469 = vmatprep.subr.mxu0 0.0
    %470 = vmatpush1.xpose.msra.mxu0 0.0
    %471 = vmatprep.mubr.f32.mxu0 0.0
    %472 = vmatmul.mubr.f32.gmra.mrb[0].mxu0 %v37
    %v473 = vpop.f32.mrb[0].mxu0
    %v474 = vadd.f32 0.0, %v473
    %v475 = vpop.f32.mrb[0].mxu0
    %476 = vdwg.mxu0
    %v478 = vsel %vm35, %v32, 0
    %480 = vmatprep.subr.mxu0 0.0
    %481 = vmatpush1.xpose.msra.mxu0 %v478
    %482 = vmatprep.subr.mxu0 0.0
    %483 = vmatpush1.xpose.msra.mxu0 0.0
    %484 = vmatprep.subr.mxu0 0.0
    %485 = vmatpush1.xpose.msra.mxu0 0.0
    %486 = vmatprep.subr.mxu0 0.0
    %487 = vmatpush1.xpose.msra.mxu0 0.0
    %488 = vmatprep.subr.mxu0 0.0
    %489 = vmatpush1.xpose.msra.mxu0 0.0
    %490 = vmatprep.subr.mxu0 0.0
    %491 = vmatpush1.xpose.msra.mxu0 0.0
    %492 = vmatprep.subr.mxu0 0.0
    %493 = vmatpush1.xpose.msra.mxu0 0.0
    %494 = vmatprep.subr.mxu0 0.0
    %495 = vmatpush1.xpose.msra.mxu0 0.0
    %496 = vmatprep.subr.mxu0 0.0
    %497 = vmatpush1.xpose.msra.mxu0 0.0
    %498 = vmatprep.subr.mxu0 0.0
    %499 = vmatpush1.xpose.msra.mxu0 0.0
    %500 = vmatprep.subr.mxu0 0.0
    %501 = vmatpush1.xpose.msra.mxu0 0.0
    %502 = vmatprep.subr.mxu0 0.0
    %503 = vmatpush1.xpose.msra.mxu0 0.0
    %504 = vmatprep.subr.mxu0 0.0
    %505 = vmatpush1.xpose.msra.mxu0 0.0
    %506 = vmatprep.subr.mxu0 0.0
    %507 = vmatpush1.xpose.msra.mxu0 0.0
    %508 = vmatprep.subr.mxu0 0.0
    %509 = vmatpush1.xpose.msra.mxu0 0.0
    %510 = vmatprep.subr.mxu0 0.0
    %511 = vmatpush1.xpose.msra.mxu0 0.0
    %512 = vmatprep.subr.mxu0 0.0
    %513 = vmatpush1.xpose.msra.mxu0 0.0
    %514 = vmatprep.subr.mxu0 0.0
    %515 = vmatpush1.xpose.msra.mxu0 0.0
    %516 = vmatprep.subr.mxu0 0.0
    %517 = vmatpush1.xpose.msra.mxu0 0.0
    %518 = vmatprep.subr.mxu0 0.0
    %519 = vmatpush1.xpose.msra.mxu0 0.0
    %520 = vmatprep.subr.mxu0 0.0
    %521 = vmatpush1.xpose.msra.mxu0 0.0
    %522 = vmatprep.subr.mxu0 0.0
    %523 = vmatpush1.xpose.msra.mxu0 0.0
    %524 = vmatprep.subr.mxu0 0.0
    %525 = vmatpush1.xpose.msra.mxu0 0.0
    %526 = vmatprep.subr.mxu0 0.0
    %527 = vmatpush1.xpose.msra.mxu0 0.0
    %528 = vmatprep.subr.mxu0 0.0
    %529 = vmatpush1.xpose.msra.mxu0 0.0
    %530 = vmatprep.subr.mxu0 0.0
    %531 = vmatpush1.xpose.msra.mxu0 0.0
    %532 = vmatprep.subr.mxu0 0.0
    %533 = vmatpush1.xpose.msra.mxu0 0.0
    %534 = vmatprep.subr.mxu0 0.0
    %535 = vmatpush1.xpose.msra.mxu0 0.0
    %536 = vmatprep.subr.mxu0 0.0
    %537 = vmatpush1.xpose.msra.mxu0 0.0
    %538 = vmatprep.subr.mxu0 0.0
    %539 = vmatpush1.xpose.msra.mxu0 0.0
    %540 = vmatprep.subr.mxu0 0.0
    %541 = vmatpush1.xpose.msra.mxu0 0.0
    %542 = vmatprep.subr.mxu0 0.0
    %543 = vmatpush1.xpose.msra.mxu0 0.0
    %544 = vmatprep.mubr.f32.mxu0 0.0
    %545 = vmatmul.mubr.f32.gmra.mrb[0].mxu0 %v37
    %v546 = vpop.f32.mrb[0].mxu0
    %v547 = vadd.f32 0.0, %v546
    %v548 = vpop.f32.mrb[0].mxu0
    %549 = vdwg.mxu0
    %v551 = vsel %vm35, %v33, 0
    %553 = vmatprep.subr.mxu0 0.0
    %554 = vmatpush1.xpose.msra.mxu0 %v551
    %555 = vmatprep.subr.mxu0 0.0
    %556 = vmatpush1.xpose.msra.mxu0 0.0
    %557 = vmatprep.subr.mxu0 0.0
    %558 = vmatpush1.xpose.msra.mxu0 0.0
    %559 = vmatprep.subr.mxu0 0.0
    %560 = vmatpush1.xpose.msra.mxu0 0.0
    %561 = vmatprep.subr.mxu0 0.0
    %562 = vmatpush1.xpose.msra.mxu0 0.0
    %563 = vmatprep.subr.mxu0 0.0
    %564 = vmatpush1.xpose.msra.mxu0 0.0
    %565 = vmatprep.subr.mxu0 0.0
    %566 = vmatpush1.xpose.msra.mxu0 0.0
    %567 = vmatprep.subr.mxu0 0.0
    %568 = vmatpush1.xpose.msra.mxu0 0.0
    %569 = vmatprep.subr.mxu0 0.0
    %570 = vmatpush1.xpose.msra.mxu0 0.0
    %571 = vmatprep.subr.mxu0 0.0
    %572 = vmatpush1.xpose.msra.mxu0 0.0
    %573 = vmatprep.subr.mxu0 0.0
    %574 = vmatpush1.xpose.msra.mxu0 0.0
    %575 = vmatprep.subr.mxu0 0.0
    %576 = vmatpush1.xpose.msra.mxu0 0.0
    %577 = vmatprep.subr.mxu0 0.0
    %578 = vmatpush1.xpose.msra.mxu0 0.0
    %579 = vmatprep.subr.mxu0 0.0
    %580 = vmatpush1.xpose.msra.mxu0 0.0
    %581 = vmatprep.subr.mxu0 0.0
    %582 = vmatpush1.xpose.msra.mxu0 0.0
    %583 = vmatprep.subr.mxu0 0.0
    %584 = vmatpush1.xpose.msra.mxu0 0.0
    %585 = vmatprep.subr.mxu0 0.0
    %586 = vmatpush1.xpose.msra.mxu0 0.0
    %587 = vmatprep.subr.mxu0 0.0
    %588 = vmatpush1.xpose.msra.mxu0 0.0
    %589 = vmatprep.subr.mxu0 0.0
    %590 = vmatpush1.xpose.msra.mxu0 0.0
    %591 = vmatprep.subr.mxu0 0.0
    %592 = vmatpush1.xpose.msra.mxu0 0.0
    %593 = vmatprep.subr.mxu0 0.0
    %594 = vmatpush1.xpose.msra.mxu0 0.0
    %595 = vmatprep.subr.mxu0 0.0
    %596 = vmatpush1.xpose.msra.mxu0 0.0
    %597 = vmatprep.subr.mxu0 0.0
    %598 = vmatpush1.xpose.msra.mxu0 0.0
    %599 = vmatprep.subr.mxu0 0.0
    %600 = vmatpush1.xpose.msra.mxu0 0.0
    %601 = vmatprep.subr.mxu0 0.0
    %602 = vmatpush1.xpose.msra.mxu0 0.0
    %603 = vmatprep.subr.mxu0 0.0
    %604 = vmatpush1.xpose.msra.mxu0 0.0
    %605 = vmatprep.subr.mxu0 0.0
    %606 = vmatpush1.xpose.msra.mxu0 0.0
    %607 = vmatprep.subr.mxu0 0.0
    %608 = vmatpush1.xpose.msra.mxu0 0.0
    %609 = vmatprep.subr.mxu0 0.0
    %610 = vmatpush1.xpose.msra.mxu0 0.0
    %611 = vmatprep.subr.mxu0 0.0
    %612 = vmatpush1.xpose.msra.mxu0 0.0
    %613 = vmatprep.subr.mxu0 0.0
    %614 = vmatpush1.xpose.msra.mxu0 0.0
    %615 = vmatprep.subr.mxu0 0.0
    %616 = vmatpush1.xpose.msra.mxu0 0.0
    %617 = vmatprep.mubr.f32.mxu0 0.0
    %618 = vmatmul.mubr.f32.gmra.mrb[0].mxu0 %v37
    %v619 = vpop.f32.mrb[0].mxu0
    %v620 = vadd.f32 0.0, %v619
    %v621 = vpop.f32.mrb[0].mxu0
    %622 = vdwg.mxu0
    %v631 = vrot.slane %v182, 7
    %vm632 = vcmask 1041409
    %v633 = vsel %vm632, %v631, %v109
    %v634 = vrot.slane %v255, 6
    %vm635 = vcmask 1042434
    %v636 = vsel %vm635, %v634, %v633
    %v637 = vrot.slane %v328, 5
    %vm638 = vcmask 1043459
    %v639 = vsel %vm638, %v637, %v636
    %v640 = vrot.slane %v401, 4
    %vm641 = vcmask 1044484
    %v642 = vsel %vm641, %v640, %v639
    %v643 = vrot.slane %v474, 3
    %vm644 = vcmask 1045509
    %v645 = vsel %vm644, %v643, %v642
    %v646 = vrot.slane %v547, 2
    %vm647 = vcmask 1046534
    %v648 = vsel %vm647, %v646, %v645
    %v649 = vrot.slane %v620, 1
    %vm650 = vcmask 1047559
    %v651 = vsel %vm650, %v649, %v648
    %vm653 = vcmask 64512
    %v654 = vsel %vm653, %v651, -inf
    %655 = vmax.xlane.f32.xlu0 %v654
    %v656 = vpop.xlane.xlu0 %655
    %v658 = vrot.slane %v656, 1
    %v659 = vrot.slane %v656, 2
    %v660 = vrot.slane %v656, 3
    %v661 = vrot.slane %v656, 4
    %v662 = vrot.slane %v656, 5
    %v663 = vrot.slane %v656, 6
    %v664 = vrot.slane %v656, 7
    %v673 = vsub.f32 %v109, %v656
    %v674 = vsub.f32 %v182, %v658
    %v675 = vsub.f32 %v255, %v659
    %v676 = vsub.f32 %v328, %v660
    %v677 = vsub.f32 %v401, %v661
    %v678 = vsub.f32 %v474, %v662
    %v679 = vsub.f32 %v547, %v663
    %v680 = vsub.f32 %v620, %v664
    %v681 = vmul.f32 %v673, 1.442695
    %v682 = vpow.pop %v681
    %v683 = vmul.f32 %v674, 1.442695
    %v684 = vpow.pop %v683
    %v685 = vmul.f32 %v675, 1.442695
    %v686 = vpow.pop %v685
    %v687 = vmul.f32 %v676, 1.442695
    %v688 = vpow.pop %v687
    %v689 = vmul.f32 %v677, 1.442695
    %v690 = vpow.pop %v689
    %v691 = vmul.f32 %v678, 1.442695
    %v692 = vpow.pop %v691
    %v693 = vmul.f32 %v679, 1.442695
    %v694 = vpow.pop %v693
    %v695 = vmul.f32 %v680, 1.442695
    %v696 = vpow.pop %v695
    %v705 = vrot.slane %v684, 7
    %v706 = vsel %vm632, %v705, %v682
    %v707 = vrot.slane %v686, 6
    %v708 = vsel %vm635, %v707, %v706
    %v709 = vrot.slane %v688, 5
    %v710 = vsel %vm638, %v709, %v708
    %v711 = vrot.slane %v690, 4
    %v712 = vsel %vm641, %v711, %v710
    %v713 = vrot.slane %v692, 3
    %v714 = vsel %vm644, %v713, %v712
    %v715 = vrot.slane %v694, 2
    %v716 = vsel %vm647, %v715, %v714
    %v717 = vrot.slane %v696, 1
    %v718 = vsel %vm650, %v717, %v716
    %v720 = vsel %vm653, %v718, 0.0
    %721 = vadd.xlane.f32.xlu0 %v720
    %v722 = vpop.xlane.xlu0 %721
    %v723 = vsel %vm653, %v682, 0
    %725 = vmatprep.subr.mxu0 0.0
    %726 = vmatpush1.msra.mxu0 %v26
    %727 = vmatprep.subr.mxu0 0.0
    %728 = vmatpush1.msra.mxu0 0.0
    %729 = vmatprep.subr.mxu0 0.0
    %730 = vmatpush1.msra.mxu0 0.0
    %731 = vmatprep.subr.mxu0 0.0
    %732 = vmatpush1.msra.mxu0 0.0
    %733 = vmatprep.subr.mxu0 0.0
    %734 = vmatpush1.msra.mxu0 0.0
    %735 = vmatprep.subr.mxu0 0.0
    %736 = vmatpush1.msra.mxu0 0.0
    %737 = vmatprep.subr.mxu0 0.0
    %738 = vmatpush1.msra.mxu0 0.0
    %739 = vmatprep.subr.mxu0 0.0
    %740 = vmatpush1.msra.mxu0 0.0
    %741 = vmatprep.subr.mxu0 0.0
    %742 = vmatpush1.msra.mxu0 0.0
    %743 = vmatprep.subr.mxu0 0.0
    %744 = vmatpush1.msra.mxu0 0.0
    %745 = vmatprep.subr.mxu0 0.0
    %746 = vmatpush1.msra.mxu0 0.0
    %747 = vmatprep.subr.mxu0 0.0
    %748 = vmatpush1.msra.mxu0 0.0
    %749 = vmatprep.subr.mxu0 0.0
    %750 = vmatpush1.msra.mxu0 0.0
    %751 = vmatprep.subr.mxu0 0.0
    %752 = vmatpush1.msra.mxu0 0.0
    %753 = vmatprep.subr.mxu0 0.0
    %754 = vmatpush1.msra.mxu0 0.0
    %755 = vmatprep.subr.mxu0 0.0
    %756 = vmatpush1.msra.mxu0 0.0
    %757 = vmatprep.subr.mxu0 0.0
    %758 = vmatpush1.msra.mxu0 0.0
    %759 = vmatprep.subr.mxu0 0.0
    %760 = vmatpush1.msra.mxu0 0.0
    %761 = vmatprep.subr.mxu0 0.0
    %762 = vmatpush1.msra.mxu0 0.0
    %763 = vmatprep.subr.mxu0 0.0
    %764 = vmatpush1.msra.mxu0 0.0
    %765 = vmatprep.subr.mxu0 0.0
    %766 = vmatpush1.msra.mxu0 0.0
    %767 = vmatprep.subr.mxu0 0.0
    %768 = vmatpush1.msra.mxu0 0.0
    %769 = vmatprep.subr.mxu0 0.0
    %770 = vmatpush1.msra.mxu0 0.0
    %771 = vmatprep.subr.mxu0 0.0
    %772 = vmatpush1.msra.mxu0 0.0
    %773 = vmatprep.subr.mxu0 0.0
    %774 = vmatpush1.msra.mxu0 0.0
    %775 = vmatprep.subr.mxu0 0.0
    %776 = vmatpush1.msra.mxu0 0.0
    %777 = vmatprep.subr.mxu0 0.0
    %778 = vmatpush1.msra.mxu0 0.0
    %779 = vmatprep.subr.mxu0 0.0
    %780 = vmatpush1.msra.mxu0 0.0
    %781 = vmatprep.subr.mxu0 0.0
    %782 = vmatpush1.msra.mxu0 0.0
    %783 = vmatprep.subr.mxu0 0.0
    %784 = vmatpush1.msra.mxu0 0.0
    %785 = vmatprep.subr.mxu0 0.0
    %786 = vmatpush1.msra.mxu0 0.0
    %787 = vmatprep.subr.mxu0 0.0
    %788 = vmatpush1.msra.mxu0 0.0
    %789 = vmatprep.mubr.f32.mxu0 0.0
    %790 = vmatmul.mubr.f32.gmra.mrb[0].mxu0 %v723
    %v791 = vpop.f32.mrb[0].mxu0
    %v792 = vadd.f32 0.0, %v791
    %v793 = vpop.f32.mrb[0].mxu0
    %794 = vdwg.mxu0
    %v795 = vsel %vm653, %v684, 0
    %797 = vmatprep.subr.mxu0 0.0
    %798 = vmatpush1.msra.mxu0 %v27
    %799 = vmatprep.subr.mxu0 0.0
    %800 = vmatpush1.msra.mxu0 0.0
    %801 = vmatprep.subr.mxu0 0.0
    %802 = vmatpush1.msra.mxu0 0.0
    %803 = vmatprep.subr.mxu0 0.0
    %804 = vmatpush1.msra.mxu0 0.0
    %805 = vmatprep.subr.mxu0 0.0
    %806 = vmatpush1.msra.mxu0 0.0
    %807 = vmatprep.subr.mxu0 0.0
    %808 = vmatpush1.msra.mxu0 0.0
    %809 = vmatprep.subr.mxu0 0.0
    %810 = vmatpush1.msra.mxu0 0.0
    %811 = vmatprep.subr.mxu0 0.0
    %812 = vmatpush1.msra.mxu0 0.0
    %813 = vmatprep.subr.mxu0 0.0
    %814 = vmatpush1.msra.mxu0 0.0
    %815 = vmatprep.subr.mxu0 0.0
    %816 = vmatpush1.msra.mxu0 0.0
    %817 = vmatprep.subr.mxu0 0.0
    %818 = vmatpush1.msra.mxu0 0.0
    %819 = vmatprep.subr.mxu0 0.0
    %820 = vmatpush1.msra.mxu0 0.0
    %821 = vmatprep.subr.mxu0 0.0
    %822 = vmatpush1.msra.mxu0 0.0
    %823 = vmatprep.subr.mxu0 0.0
    %824 = vmatpush1.msra.mxu0 0.0
    %825 = vmatprep.subr.mxu0 0.0
    %826 = vmatpush1.msra.mxu0 0.0
    %827 = vmatprep.subr.mxu0 0.0
    %828 = vmatpush1.msra.mxu0 0.0
    %829 = vmatprep.subr.mxu0 0.0
    %830 = vmatpush1.msra.mxu0 0.0
    %831 = vmatprep.subr.mxu0 0.0
    %832 = vmatpush1.msra.mxu0 0.0
    %833 = vmatprep.subr.mxu0 0.0
    %834 = vmatpush1.msra.mxu0 0.0
    %835 = vmatprep.subr.mxu0 0.0
    %836 = vmatpush1.msra.mxu0 0.0
    %837 = vmatprep.subr.mxu0 0.0
    %838 = vmatpush1.msra.mxu0 0.0
    %839 = vmatprep.subr.mxu0 0.0
    %840 = vmatpush1.msra.mxu0 0.0
    %841 = vmatprep.subr.mxu0 0.0
    %842 = vmatpush1.msra.mxu0 0.0
    %843 = vmatprep.subr.mxu0 0.0
    %844 = vmatpush1.msra.mxu0 0.0
    %845 = vmatprep.subr.mxu0 0.0
    %846 = vmatpush1.msra.mxu0 0.0
    %847 = vmatprep.subr.mxu0 0.0
    %848 = vmatpush1.msra.mxu0 0.0
    %849 = vmatprep.subr.mxu0 0.0
    %850 = vmatpush1.msra.mxu0 0.0
    %851 = vmatprep.subr.mxu0 0.0
    %852 = vmatpush1.msra.mxu0 0.0
    %853 = vmatprep.subr.mxu0 0.0
    %854 = vmatpush1.msra.mxu0 0.0
    %855 = vmatprep.subr.mxu0 0.0
    %856 = vmatpush1.msra.mxu0 0.0
    %857 = vmatprep.subr.mxu0 0.0
    %858 = vmatpush1.msra.mxu0 0.0
    %859 = vmatprep.subr.mxu0 0.0
    %860 = vmatpush1.msra.mxu0 0.0
    %861 = vmatprep.mubr.f32.mxu0 0.0
    %862 = vmatmul.mubr.f32.gmra.mrb[0].mxu0 %v795
    %v863 = vpop.f32.mrb[0].mxu0
    %v864 = vadd.f32 0.0, %v863
    %v865 = vpop.f32.mrb[0].mxu0
    %866 = vdwg.mxu0
    %v867 = vsel %vm653, %v686, 0
    %869 = vmatprep.subr.mxu0 0.0
    %870 = vmatpush1.msra.mxu0 %v28
    %871 = vmatprep.subr.mxu0 0.0
    %872 = vmatpush1.msra.mxu0 0.0
    %873 = vmatprep.subr.mxu0 0.0
    %874 = vmatpush1.msra.mxu0 0.0
    %875 = vmatprep.subr.mxu0 0.0
    %876 = vmatpush1.msra.mxu0 0.0
    %877 = vmatprep.subr.mxu0 0.0
    %878 = vmatpush1.msra.mxu0 0.0
    %879 = vmatprep.subr.mxu0 0.0
    %880 = vmatpush1.msra.mxu0 0.0
    %881 = vmatprep.subr.mxu0 0.0
    %882 = vmatpush1.msra.mxu0 0.0
    %883 = vmatprep.subr.mxu0 0.0
    %884 = vmatpush1.msra.mxu0 0.0
    %885 = vmatprep.subr.mxu0 0.0
    %886 = vmatpush1.msra.mxu0 0.0
    %887 = vmatprep.subr.mxu0 0.0
    %888 = vmatpush1.msra.mxu0 0.0
    %889 = vmatprep.subr.mxu0 0.0
    %890 = vmatpush1.msra.mxu0 0.0
    %891 = vmatprep.subr.mxu0 0.0
    %892 = vmatpush1.msra.mxu0 0.0
    %893 = vmatprep.subr.mxu0 0.0
    %894 = vmatpush1.msra.mxu0 0.0
    %895 = vmatprep.subr.mxu0 0.0
    %896 = vmatpush1.msra.mxu0 0.0
    %897 = vmatprep.subr.mxu0 0.0
    %898 = vmatpush1.msra.mxu0 0.0
    %899 = vmatprep.subr.mxu0 0.0
    %900 = vmatpush1.msra.mxu0 0.0
    %901 = vmatprep.subr.mxu0 0.0
    %902 = vmatpush1.msra.mxu0 0.0
    %903 = vmatprep.subr.mxu0 0.0
    %904 = vmatpush1.msra.mxu0 0.0
    %905 = vmatprep.subr.mxu0 0.0
    %906 = vmatpush1.msra.mxu0 0.0
    %907 = vmatprep.subr.mxu0 0.0
    %908 = vmatpush1.msra.mxu0 0.0
    %909 = vmatprep.subr.mxu0 0.0
    %910 = vmatpush1.msra.mxu0 0.0
    %911 = vmatprep.subr.mxu0 0.0
    %912 = vmatpush1.msra.mxu0 0.0
    %913 = vmatprep.subr.mxu0 0.0
    %914 = vmatpush1.msra.mxu0 0.0
    %915 = vmatprep.subr.mxu0 0.0
    %916 = vmatpush1.msra.mxu0 0.0
    %917 = vmatprep.subr.mxu0 0.0
    %918 = vmatpush1.msra.mxu0 0.0
    %919 = vmatprep.subr.mxu0 0.0
    %920 = vmatpush1.msra.mxu0 0.0
    %921 = vmatprep.subr.mxu0 0.0
    %922 = vmatpush1.msra.mxu0 0.0
    %923 = vmatprep.subr.mxu0 0.0
    %924 = vmatpush1.msra.mxu0 0.0
    %925 = vmatprep.subr.mxu0 0.0
    %926 = vmatpush1.msra.mxu0 0.0
    %927 = vmatprep.subr.mxu0 0.0
    %928 = vmatpush1.msra.mxu0 0.0
    %929 = vmatprep.subr.mxu0 0.0
    %930 = vmatpush1.msra.mxu0 0.0
    %931 = vmatprep.subr.mxu0 0.0
    %932 = vmatpush1.msra.mxu0 0.0
    %933 = vmatprep.mubr.f32.mxu0 0.0
    %934 = vmatmul.mubr.f32.gmra.mrb[0].mxu0 %v867
    %v935 = vpop.f32.mrb[0].mxu0
    %v936 = vadd.f32 0.0, %v935
    %v937 = vpop.f32.mrb[0].mxu0
    %938 = vdwg.mxu0
    %v939 = vsel %vm653, %v688, 0
    %941 = vmatprep.subr.mxu0 0.0
    %942 = vmatpush1.msra.mxu0 %v29
    %943 = vmatprep.subr.mxu0 0.0
    %944 = vmatpush1.msra.mxu0 0.0
    %945 = vmatprep.subr.mxu0 0.0
    %946 = vmatpush1.msra.mxu0 0.0
    %947 = vmatprep.subr.mxu0 0.0
    %948 = vmatpush1.msra.mxu0 0.0
    %949 = vmatprep.subr.mxu0 0.0
    %950 = vmatpush1.msra.mxu0 0.0
    %951 = vmatprep.subr.mxu0 0.0
    %952 = vmatpush1.msra.mxu0 0.0
    %953 = vmatprep.subr.mxu0 0.0
    %954 = vmatpush1.msra.mxu0 0.0
    %955 = vmatprep.subr.mxu0 0.0
    %956 = vmatpush1.msra.mxu0 0.0
    %957 = vmatprep.subr.mxu0 0.0
    %958 = vmatpush1.msra.mxu0 0.0
    %959 = vmatprep.subr.mxu0 0.0
    %960 = vmatpush1.msra.mxu0 0.0
    %961 = vmatprep.subr.mxu0 0.0
    %962 = vmatpush1.msra.mxu0 0.0
    %963 = vmatprep.subr.mxu0 0.0
    %964 = vmatpush1.msra.mxu0 0.0
    %965 = vmatprep.subr.mxu0 0.0
    %966 = vmatpush1.msra.mxu0 0.0
    %967 = vmatprep.subr.mxu0 0.0
    %968 = vmatpush1.msra.mxu0 0.0
    %969 = vmatprep.subr.mxu0 0.0
    %970 = vmatpush1.msra.mxu0 0.0
    %971 = vmatprep.subr.mxu0 0.0
    %972 = vmatpush1.msra.mxu0 0.0
    %973 = vmatprep.subr.mxu0 0.0
    %974 = vmatpush1.msra.mxu0 0.0
    %975 = vmatprep.subr.mxu0 0.0
    %976 = vmatpush1.msra.mxu0 0.0
    %977 = vmatprep.subr.mxu0 0.0
    %978 = vmatpush1.msra.mxu0 0.0
    %979 = vmatprep.subr.mxu0 0.0
    %980 = vmatpush1.msra.mxu0 0.0
    %981 = vmatprep.subr.mxu0 0.0
    %982 = vmatpush1.msra.mxu0 0.0
    %983 = vmatprep.subr.mxu0 0.0
    %984 = vmatpush1.msra.mxu0 0.0
    %985 = vmatprep.subr.mxu0 0.0
    %986 = vmatpush1.msra.mxu0 0.0
    %987 = vmatprep.subr.mxu0 0.0
    %988 = vmatpush1.msra.mxu0 0.0
    %989 = vmatprep.subr.mxu0 0.0
    %990 = vmatpush1.msra.mxu0 0.0
    %991 = vmatprep.subr.mxu0 0.0
    %992 = vmatpush1.msra.mxu0 0.0
    %993 = vmatprep.subr.mxu0 0.0
    %994 = vmatpush1.msra.mxu0 0.0
    %995 = vmatprep.subr.mxu0 0.0
    %996 = vmatpush1.msra.mxu0 0.0
    %997 = vmatprep.subr.mxu0 0.0
    %998 = vmatpush1.msra.mxu0 0.0
    %999 = vmatprep.subr.mxu0 0.0
    %1000 = vmatpush1.msra.mxu0 0.0
    %1001 = vmatprep.subr.mxu0 0.0
    %1002 = vmatpush1.msra.mxu0 0.0
    %1003 = vmatprep.subr.mxu0 0.0
    %1004 = vmatpush1.msra.mxu0 0.0
    %1005 = vmatprep.mubr.f32.mxu0 0.0
    %1006 = vmatmul.mubr.f32.gmra.mrb[0].mxu0 %v939
    %v1007 = vpop.f32.mrb[0].mxu0
    %v1008 = vadd.f32 0.0, %v1007
    %v1009 = vpop.f32.mrb[0].mxu0
    %1010 = vdwg.mxu0
    %v1011 = vsel %vm653, %v690, 0
    %1013 = vmatprep.subr.mxu0 0.0
    %1014 = vmatpush1.msra.mxu0 %v30
    %1015 = vmatprep.subr.mxu0 0.0
    %1016 = vmatpush1.msra.mxu0 0.0
    %1017 = vmatprep.subr.mxu0 0.0
    %1018 = vmatpush1.msra.mxu0 0.0
    %1019 = vmatprep.subr.mxu0 0.0
    %1020 = vmatpush1.msra.mxu0 0.0
    %1021 = vmatprep.subr.mxu0 0.0
    %1022 = vmatpush1.msra.mxu0 0.0
    %1023 = vmatprep.subr.mxu0 0.0
    %1024 = vmatpush1.msra.mxu0 0.0
    %1025 = vmatprep.subr.mxu0 0.0
    %1026 = vmatpush1.msra.mxu0 0.0
    %1027 = vmatprep.subr.mxu0 0.0
    %1028 = vmatpush1.msra.mxu0 0.0
    %1029 = vmatprep.subr.mxu0 0.0
    %1030 = vmatpush1.msra.mxu0 0.0
    %1031 = vmatprep.subr.mxu0 0.0
    %1032 = vmatpush1.msra.mxu0 0.0
    %1033 = vmatprep.subr.mxu0 0.0
    %1034 = vmatpush1.msra.mxu0 0.0
    %1035 = vmatprep.subr.mxu0 0.0
    %1036 = vmatpush1.msra.mxu0 0.0
    %1037 = vmatprep.subr.mxu0 0.0
    %1038 = vmatpush1.msra.mxu0 0.0
    %1039 = vmatprep.subr.mxu0 0.0
    %1040 = vmatpush1.msra.mxu0 0.0
    %1041 = vmatprep.subr.mxu0 0.0
    %1042 = vmatpush1.msra.mxu0 0.0
    %1043 = vmatprep.subr.mxu0 0.0
    %1044 = vmatpush1.msra.mxu0 0.0
    %1045 = vmatprep.subr.mxu0 0.0
    %1046 = vmatpush1.msra.mxu0 0.0
    %1047 = vmatprep.subr.mxu0 0.0
    %1048 = vmatpush1.msra.mxu0 0.0
    %1049 = vmatprep.subr.mxu0 0.0
    %1050 = vmatpush1.msra.mxu0 0.0
    %1051 = vmatprep.subr.mxu0 0.0
    %1052 = vmatpush1.msra.mxu0 0.0
    %1053 = vmatprep.subr.mxu0 0.0
    %1054 = vmatpush1.msra.mxu0 0.0
    %1055 = vmatprep.subr.mxu0 0.0
    %1056 = vmatpush1.msra.mxu0 0.0
    %1057 = vmatprep.subr.mxu0 0.0
    %1058 = vmatpush1.msra.mxu0 0.0
    %1059 = vmatprep.subr.mxu0 0.0
    %1060 = vmatpush1.msra.mxu0 0.0
    %1061 = vmatprep.subr.mxu0 0.0
    %1062 = vmatpush1.msra.mxu0 0.0
    %1063 = vmatprep.subr.mxu0 0.0
    %1064 = vmatpush1.msra.mxu0 0.0
    %1065 = vmatprep.subr.mxu0 0.0
    %1066 = vmatpush1.msra.mxu0 0.0
    %1067 = vmatprep.subr.mxu0 0.0
    %1068 = vmatpush1.msra.mxu0 0.0
    %1069 = vmatprep.subr.mxu0 0.0
    %1070 = vmatpush1.msra.mxu0 0.0
    %1071 = vmatprep.subr.mxu0 0.0
    %1072 = vmatpush1.msra.mxu0 0.0
    %1073 = vmatprep.subr.mxu0 0.0
    %1074 = vmatpush1.msra.mxu0 0.0
    %1075 = vmatprep.subr.mxu0 0.0
    %1076 = vmatpush1.msra.mxu0 0.0
    %1077 = vmatprep.mubr.f32.mxu0 0.0
    %1078 = vmatmul.mubr.f32.gmra.mrb[0].mxu0 %v1011
    %v1079 = vpop.f32.mrb[0].mxu0
    %v1080 = vadd.f32 0.0, %v1079
    %v1081 = vpop.f32.mrb[0].mxu0
    %1082 = vdwg.mxu0
    %v1083 = vsel %vm653, %v692, 0
    %1085 = vmatprep.subr.mxu0 0.0
    %1086 = vmatpush1.msra.mxu0 %v31
    %1087 = vmatprep.subr.mxu0 0.0
    %1088 = vmatpush1.msra.mxu0 0.0
    %1089 = vmatprep.subr.mxu0 0.0
    %1090 = vmatpush1.msra.mxu0 0.0
    %1091 = vmatprep.subr.mxu0 0.0
    %1092 = vmatpush1.msra.mxu0 0.0
    %1093 = vmatprep.subr.mxu0 0.0
    %1094 = vmatpush1.msra.mxu0 0.0
    %1095 = vmatprep.subr.mxu0 0.0
    %1096 = vmatpush1.msra.mxu0 0.0
    %1097 = vmatprep.subr.mxu0 0.0
    %1098 = vmatpush1.msra.mxu0 0.0
    %1099 = vmatprep.subr.mxu0 0.0
    %1100 = vmatpush1.msra.mxu0 0.0
    %1101 = vmatprep.subr.mxu0 0.0
    %1102 = vmatpush1.msra.mxu0 0.0
    %1103 = vmatprep.subr.mxu0 0.0
    %1104 = vmatpush1.msra.mxu0 0.0
    %1105 = vmatprep.subr.mxu0 0.0
    %1106 = vmatpush1.msra.mxu0 0.0
    %1107 = vmatprep.subr.mxu0 0.0
    %1108 = vmatpush1.msra.mxu0 0.0
    %1109 = vmatprep.subr.mxu0 0.0
    %1110 = vmatpush1.msra.mxu0 0.0
    %1111 = vmatprep.subr.mxu0 0.0
    %1112 = vmatpush1.msra.mxu0 0.0
    %1113 = vmatprep.subr.mxu0 0.0
    %1114 = vmatpush1.msra.mxu0 0.0
    %1115 = vmatprep.subr.mxu0 0.0
    %1116 = vmatpush1.msra.mxu0 0.0
    %1117 = vmatprep.subr.mxu0 0.0
    %1118 = vmatpush1.msra.mxu0 0.0
    %1119 = vmatprep.subr.mxu0 0.0
    %1120 = vmatpush1.msra.mxu0 0.0
    %1121 = vmatprep.subr.mxu0 0.0
    %1122 = vmatpush1.msra.mxu0 0.0
    %1123 = vmatprep.subr.mxu0 0.0
    %1124 = vmatpush1.msra.mxu0 0.0
    %1125 = vmatprep.subr.mxu0 0.0
    %1126 = vmatpush1.msra.mxu0 0.0
    %1127 = vmatprep.subr.mxu0 0.0
    %1128 = vmatpush1.msra.mxu0 0.0
    %1129 = vmatprep.subr.mxu0 0.0
    %1130 = vmatpush1.msra.mxu0 0.0
    %1131 = vmatprep.subr.mxu0 0.0
    %1132 = vmatpush1.msra.mxu0 0.0
    %1133 = vmatprep.subr.mxu0 0.0
    %1134 = vmatpush1.msra.mxu0 0.0
    %1135 = vmatprep.subr.mxu0 0.0
    %1136 = vmatpush1.msra.mxu0 0.0
    %1137 = vmatprep.subr.mxu0 0.0
    %1138 = vmatpush1.msra.mxu0 0.0
    %1139 = vmatprep.subr.mxu0 0.0
    %1140 = vmatpush1.msra.mxu0 0.0
    %1141 = vmatprep.subr.mxu0 0.0
    %1142 = vmatpush1.msra.mxu0 0.0
    %1143 = vmatprep.subr.mxu0 0.0
    %1144 = vmatpush1.msra.mxu0 0.0
    %1145 = vmatprep.subr.mxu0 0.0
    %1146 = vmatpush1.msra.mxu0 0.0
    %1147 = vmatprep.subr.mxu0 0.0
    %1148 = vmatpush1.msra.mxu0 0.0
    %1149 = vmatprep.mubr.f32.mxu0 0.0
    %1150 = vmatmul.mubr.f32.gmra.mrb[0].mxu0 %v1083
    %v1151 = vpop.f32.mrb[0].mxu0
    %v1152 = vadd.f32 0.0, %v1151
    %v1153 = vpop.f32.mrb[0].mxu0
    %1154 = vdwg.mxu0
    %v1155 = vsel %vm653, %v694, 0
    %1157 = vmatprep.subr.mxu0 0.0
    %1158 = vmatpush1.msra.mxu0 %v32
    %1159 = vmatprep.subr.mxu0 0.0
    %1160 = vmatpush1.msra.mxu0 0.0
    %1161 = vmatprep.subr.mxu0 0.0
    %1162 = vmatpush1.msra.mxu0 0.0
    %1163 = vmatprep.subr.mxu0 0.0
    %1164 = vmatpush1.msra.mxu0 0.0
    %1165 = vmatprep.subr.mxu0 0.0
    %1166 = vmatpush1.msra.mxu0 0.0
    %1167 = vmatprep.subr.mxu0 0.0
    %1168 = vmatpush1.msra.mxu0 0.0
    %1169 = vmatprep.subr.mxu0 0.0
    %1170 = vmatpush1.msra.mxu0 0.0
    %1171 = vmatprep.subr.mxu0 0.0
    %1172 = vmatpush1.msra.mxu0 0.0
    %1173 = vmatprep.subr.mxu0 0.0
    %1174 = vmatpush1.msra.mxu0 0.0
    %1175 = vmatprep.subr.mxu0 0.0
    %1176 = vmatpush1.msra.mxu0 0.0
    %1177 = vmatprep.subr.mxu0 0.0
    %1178 = vmatpush1.msra.mxu0 0.0
    %1179 = vmatprep.subr.mxu0 0.0
    %1180 = vmatpush1.msra.mxu0 0.0
    %1181 = vmatprep.subr.mxu0 0.0
    %1182 = vmatpush1.msra.mxu0 0.0
    %1183 = vmatprep.subr.mxu0 0.0
    %1184 = vmatpush1.msra.mxu0 0.0
    %1185 = vmatprep.subr.mxu0 0.0
    %1186 = vmatpush1.msra.mxu0 0.0
    %1187 = vmatprep.subr.mxu0 0.0
    %1188 = vmatpush1.msra.mxu0 0.0
    %1189 = vmatprep.subr.mxu0 0.0
    %1190 = vmatpush1.msra.mxu0 0.0
    %1191 = vmatprep.subr.mxu0 0.0
    %1192 = vmatpush1.msra.mxu0 0.0
    %1193 = vmatprep.subr.mxu0 0.0
    %1194 = vmatpush1.msra.mxu0 0.0
    %1195 = vmatprep.subr.mxu0 0.0
    %1196 = vmatpush1.msra.mxu0 0.0
    %1197 = vmatprep.subr.mxu0 0.0
    %1198 = vmatpush1.msra.mxu0 0.0
    %1199 = vmatprep.subr.mxu0 0.0
    %1200 = vmatpush1.msra.mxu0 0.0
    %1201 = vmatprep.subr.mxu0 0.0
    %1202 = vmatpush1.msra.mxu0 0.0
    %1203 = vmatprep.subr.mxu0 0.0
    %1204 = vmatpush1.msra.mxu0 0.0
    %1205 = vmatprep.subr.mxu0 0.0
    %1206 = vmatpush1.msra.mxu0 0.0
    %1207 = vmatprep.subr.mxu0 0.0
    %1208 = vmatpush1.msra.mxu0 0.0
    %1209 = vmatprep.subr.mxu0 0.0
    %1210 = vmatpush1.msra.mxu0 0.0
    %1211 = vmatprep.subr.mxu0 0.0
    %1212 = vmatpush1.msra.mxu0 0.0
    %1213 = vmatprep.subr.mxu0 0.0
    %1214 = vmatpush1.msra.mxu0 0.0
    %1215 = vmatprep.subr.mxu0 0.0
    %1216 = vmatpush1.msra.mxu0 0.0
    %1217 = vmatprep.subr.mxu0 0.0
    %1218 = vmatpush1.msra.mxu0 0.0
    %1219 = vmatprep.subr.mxu0 0.0
    %1220 = vmatpush1.msra.mxu0 0.0
    %1221 = vmatprep.mubr.f32.mxu0 0.0
    %1222 = vmatmul.mubr.f32.gmra.mrb[0].mxu0 %v1155
    %v1223 = vpop.f32.mrb[0].mxu0
    %v1224 = vadd.f32 0.0, %v1223
    %v1225 = vpop.f32.mrb[0].mxu0
    %1226 = vdwg.mxu0
    %v1227 = vsel %vm653, %v696, 0
    %1229 = vmatprep.subr.mxu0 0.0
    %1230 = vmatpush1.msra.mxu0 %v33
    %1231 = vmatprep.subr.mxu0 0.0
    %1232 = vmatpush1.msra.mxu0 0.0
    %1233 = vmatprep.subr.mxu0 0.0
    %1234 = vmatpush1.msra.mxu0 0.0
    %1235 = vmatprep.subr.mxu0 0.0
    %1236 = vmatpush1.msra.mxu0 0.0
    %1237 = vmatprep.subr.mxu0 0.0
    %1238 = vmatpush1.msra.mxu0 0.0
    %1239 = vmatprep.subr.mxu0 0.0
    %1240 = vmatpush1.msra.mxu0 0.0
    %1241 = vmatprep.subr.mxu0 0.0
    %1242 = vmatpush1.msra.mxu0 0.0
    %1243 = vmatprep.subr.mxu0 0.0
    %1244 = vmatpush1.msra.mxu0 0.0
    %1245 = vmatprep.subr.mxu0 0.0
    %1246 = vmatpush1.msra.mxu0 0.0
    %1247 = vmatprep.subr.mxu0 0.0
    %1248 = vmatpush1.msra.mxu0 0.0
    %1249 = vmatprep.subr.mxu0 0.0
    %1250 = vmatpush1.msra.mxu0 0.0
    %1251 = vmatprep.subr.mxu0 0.0
    %1252 = vmatpush1.msra.mxu0 0.0
    %1253 = vmatprep.subr.mxu0 0.0
    %1254 = vmatpush1.msra.mxu0 0.0
    %1255 = vmatprep.subr.mxu0 0.0
    %1256 = vmatpush1.msra.mxu0 0.0
    %1257 = vmatprep.subr.mxu0 0.0
    %1258 = vmatpush1.msra.mxu0 0.0
    %1259 = vmatprep.subr.mxu0 0.0
    %1260 = vmatpush1.msra.mxu0 0.0
    %1261 = vmatprep.subr.mxu0 0.0
    %1262 = vmatpush1.msra.mxu0 0.0
    %1263 = vmatprep.subr.mxu0 0.0
    %1264 = vmatpush1.msra.mxu0 0.0
    %1265 = vmatprep.subr.mxu0 0.0
    %1266 = vmatpush1.msra.mxu0 0.0
    %1267 = vmatprep.subr.mxu0 0.0
    %1268 = vmatpush1.msra.mxu0 0.0
    %1269 = vmatprep.subr.mxu0 0.0
    %1270 = vmatpush1.msra.mxu0 0.0
    %1271 = vmatprep.subr.mxu0 0.0
    %1272 = vmatpush1.msra.mxu0 0.0
    %1273 = vmatprep.subr.mxu0 0.0
    %1274 = vmatpush1.msra.mxu0 0.0
    %1275 = vmatprep.subr.mxu0 0.0
    %1276 = vmatpush1.msra.mxu0 0.0
    %1277 = vmatprep.subr.mxu0 0.0
    %1278 = vmatpush1.msra.mxu0 0.0
    %1279 = vmatprep.subr.mxu0 0.0
    %1280 = vmatpush1.msra.mxu0 0.0
    %1281 = vmatprep.subr.mxu0 0.0
    %1282 = vmatpush1.msra.mxu0 0.0
    %1283 = vmatprep.subr.mxu0 0.0
    %1284 = vmatpush1.msra.mxu0 0.0
    %1285 = vmatprep.subr.mxu0 0.0
    %1286 = vmatpush1.msra.mxu0 0.0
    %1287 = vmatprep.subr.mxu0 0.0
    %1288 = vmatpush1.msra.mxu0 0.0
    %1289 = vmatprep.subr.mxu0 0.0
    %1290 = vmatpush1.msra.mxu0 0.0
    %1291 = vmatprep.subr.mxu0 0.0
    %1292 = vmatpush1.msra.mxu0 0.0
    %1293 = vmatprep.mubr.f32.mxu0 0.0
    %1294 = vmatmul.mubr.f32.gmra.mrb[0].mxu0 %v1227
    %v1295 = vpop.f32.mrb[0].mxu0
    %v1296 = vadd.f32 0.0, %v1295
    %v1297 = vpop.f32.mrb[0].mxu0
    %1298 = vdwg.mxu0
    %v1299 = vrcp.pop %v722
    %v1301 = vrot.slane %v1299, 1
    %v1302 = vrot.slane %v1299, 2
    %v1303 = vrot.slane %v1299, 3
    %v1304 = vrot.slane %v1299, 4
    %v1305 = vrot.slane %v1299, 5
    %v1306 = vrot.slane %v1299, 6
    %v1307 = vrot.slane %v1299, 7
    %v1316 = vmul.f32 %v792, %v1299
    %v1317 = vmul.f32 %v864, %v1301
    %v1318 = vmul.f32 %v936, %v1302
    %v1319 = vmul.f32 %v1008, %v1303
    %v1320 = vmul.f32 %v1080, %v1304
    %v1321 = vmul.f32 %v1152, %v1305
    %v1322 = vmul.f32 %v1224, %v1306
    %v1323 = vmul.f32 %v1296, %v1307
    %v1332 = vrot.slane %v1317, 7
    %v1333 = vsel %vm632, %v1332, %v1316
    %v1334 = vrot.slane %v1318, 6
    %v1335 = vsel %vm635, %v1334, %v1333
    %v1336 = vrot.slane %v1319, 5
    %v1337 = vsel %vm638, %v1336, %v1335
    %v1338 = vrot.slane %v1320, 4
    %v1339 = vsel %vm641, %v1338, %v1337
    %v1340 = vrot.slane %v1321, 3
    %v1341 = vsel %vm644, %v1340, %v1339
    %v1342 = vrot.slane %v1322, 2
    %v1343 = vsel %vm647, %v1342, %v1341
    %v1344 = vrot.slane %v1323, 1
    %v1345 = vsel %vm650, %v1344, %v1343
    %1347 = vst.msk [vmem:[#allocation5] sm:$0xff] %vm35, %v1345
    // Predicated region
    $region14: #{tpu_custom_call.1} parent=1 // pred_check
      _
    $region15: #{tpu_custom_call.1} parent=1 // pred_check_branch
      %1349 = sbr.rel (0) target = $region17
    $region16: #{tpu_custom_call.1} parent=1 // pred_region
      %s1351 = ssub.s32 128, 128
      %1352 = vsyncadd [#allocation4], %s1351
      %s1354 = sshll.u32 [#allocation5], 4
      %s1355 = int_to_ptr.vmem [resolvable:$true] %s1354
      %1357 = dma.vmem_to_hbm [thread:$0]  %s1355, 128, %s2, [#allocation4]
    $region17: #{tpu_custom_call.1} parent=1 // pred_fallthru
      _
    // Predicated region
    $region18: #{tpu_custom_call.1} parent=1 // pred_check
      _
    $region19: #{tpu_custom_call.1} parent=1 // pred_check_branch
      %1359 = sbr.rel (0) target = $region21
    $region20: #{tpu_custom_call.1} parent=1 // pred_region
      %1360 = dma.done [#allocation4], 128
    $region21: #{tpu_custom_call.1} parent=1 // pred_fallthru
      _
    %1361 = vsyncpa [#allocation3], 1
    %1362 = vsyncpa [#allocation4], 1

</llo_original>
